<compile_context>
chip_gen: v7x
topology: tpu7x:2x2x1
jax: 0.10.0
libtpu: 0.0.40
codegen_flags: <defaults>
</compile_context>

<pallas_src>
import jax
import jax.numpy as jnp
from jax import lax
from jax.experimental import pallas as pl
from jax.experimental.pallas import tpu as pltpu
import numpy as np


def gaussian_rnn_kernel(x_ref, waug_ref, wib_ref, bout_ref,
                        mean_ref, lv_ref, r_scr):
    """One (batch_tile, seq_chunk) grid step of the RNN forward.

    Block shapes:
      x_ref    : (C, bt)   pre-rolled input chunk, time on sublanes, batch on lanes
      waug_ref : (HA, H)   [W_hh ; zero pad ; W_out ; zero pad], HA = round8(H)+8
      wib_ref  : (H, 2)    col 0 = w_ih, col 1 = b_ih + b_hh
      bout_ref : (2, 1)    output-layer bias [b_mean, b_log_var]
      mean_ref : (C, bt)   output chunk (lane-dense over batch)
      lv_ref   : (C, bt)   output chunk (lane-dense over batch)
      r_scr    : (H, bt)   carried matvec r_t = W_hh @ h_t across seq chunks
    """
    C = x_ref.shape[0]
    H = wib_ref.shape[0]
    Hr = waug_ref.shape[0] - 8          # 8-aligned row offset of the W_out rows

    # New batch tile starts here (seq-chunk axis is the inner "arbitrary" axis).
    @pl.when(pl.program_id(1) == 0)
    def _init():
        r_scr[...] = jnp.zeros_like(r_scr)

    # Hoist all weight loads out of the serial recurrence loop.
    w_aug = waug_ref[...]               # (HA, H)
    wib = wib_ref[...]                  # (H, 2)
    wih = wib[:, 0:1]                   # (H, 1)
    bias = wib[:, 1:2]                  # (H, 1)
    bout = bout_ref[...]                # (2, 1)
    b_mean = bout[0:1, :]               # (1, 1)
    b_lv = bout[1:2, :]                 # (1, 1)

    def step(t, r):
        # x-dependent pre-activation is independent of the carry, so it overlaps
        # the previous step's MXU/EUP latency under unrolling.
        x_row = x_ref[pl.ds(t, 1), :]                                 # (1, bt)
        h = jnp.tanh(wih * x_row + bias + r)                          # (H, bt)
        # One MXU op gives both the next-step matvec and the 2 output rows.
        aug = jnp.dot(w_aug, h, preferred_element_type=jnp.float32)   # (HA, bt)
        mean_ref[pl.ds(t, 1), :] = aug[Hr:Hr + 1, :] + b_mean
        lv_ref[pl.ds(t, 1), :] = aug[Hr + 1:Hr + 2, :] + b_lv
        return aug[:H, :]                                             # r_t

    r_last = lax.fori_loop(0, C, step, r_scr[...], unroll=min(8, C))
    r_scr[...] = r_last       # carry the matvec into the next seq chunk


def _pick_batch_tile(B):
    # 128 lanes fills a vreg row on every generation and yields >=2 parallel
    # tiles (megacore / v7x dual-TC) whenever B is a multiple of 128.
    if B % 128 == 0:
        return 128
    return B   # block dim == full array dim is always a legal block shape


def _pick_seq_chunk(S):
    if S <= 512:
        return S
    for c in (512, 256, 128, 64, 32, 16, 8):
        if S % c == 0:
            return c
    return S   # TODO(synk): ragged sequence lengths fall back to a single chunk


def _vmem_limit_bytes(C, bt, H):
    def rup(x, m):
        return ((x + m - 1) // m) * m
    btp, cp = rup(bt, 128), rup(C, 8)
    hs, hl = rup(H, 8), rup(H, 128)
    est = 4 * (
        2 * cp * btp            # x chunk, double buffered
        + 2 * 2 * cp * btp      # mean / log_var chunks, double buffered
        + 2 * (hs + 8) * hl     # W_aug (+ second buffer)
        + 2 * (hs + 8) * 128    # small column params, padded + double buffered
        + hs * btp              # carried-matvec scratch
    )
    return int(min(64 * 1024 * 1024, max(16 * 1024 * 1024, 2 * est)))


@jax.jit
def gaussian_rnn_forward(x, w_ih, w_hh, b_ih, b_hh, w_out, b_out):
    """Forward pass. Params are in PyTorch orientation:
       w_ih (H,1), w_hh (H,H), b_ih (H,), b_hh (H,), w_out (2,H), b_out (2,)."""
    B, S = x.shape
    H = w_hh.shape[0]
    Hr = ((H + 7) // 8) * 8      # 8-aligned offset for the output rows
    HA = Hr + 8

    # torch: x = x.roll(1, 1); x[:, 0] = 0   (pure-functional), then time-major.
    x_shift = jnp.concatenate([jnp.zeros((B, 1), x.dtype), x[:, :-1]], axis=1)
    x_tm = jnp.transpose(x_shift).astype(jnp.float32)            # (S, B) lane-dense

    # Augmented weight matrix: rows [0:H) = W_hh, rows [Hr:Hr+2) = W_out.
    w_aug = jnp.zeros((HA, H), jnp.float32)
    w_aug = w_aug.at[:H, :].set(w_hh.astype(jnp.float32))
    w_aug = w_aug.at[Hr:Hr + 2, :].set(w_out.astype(jnp.float32))
    wib = jnp.stack(
        [w_ih.reshape(H), (b_ih + b_hh)], axis=1).astype(jnp.float32)   # (H, 2)
    bout = b_out.reshape(2, 1).astype(jnp.float32)                      # (2, 1)

    bt = _pick_batch_tile(B)
    C = _pick_seq_chunk(S)
    grid = (B // bt, S // C)

    const = lambda ib, is_: (0, 0)
    in_specs = [
        pl.BlockSpec((C, bt), lambda ib, is_: (is_, ib)),   # x (S, B)
        pl.BlockSpec((HA, H), const),                       # W_aug
        pl.BlockSpec((H, 2), const),                        # [w_ih | b_ih+b_hh]
        pl.BlockSpec((2, 1), const),                        # b_out
    ]
    out_specs = (
        pl.BlockSpec((C, bt), lambda ib, is_: (is_, ib)),   # mean (S, B)
        pl.BlockSpec((C, bt), lambda ib, is_: (is_, ib)),   # log_var (S, B)
    )

    mean_tm, lv_tm = pl.pallas_call(
        gaussian_rnn_kernel,
        out_shape=(jax.ShapeDtypeStruct((S, B), jnp.float32),
                   jax.ShapeDtypeStruct((S, B), jnp.float32)),
        grid=grid,
        in_specs=in_specs,
        out_specs=out_specs,
        scratch_shapes=[pltpu.VMEM((H, bt), jnp.float32)],
        compiler_params=pltpu.CompilerParams(
            dimension_semantics=("parallel", "arbitrary"),
            vmem_limit_bytes=_vmem_limit_bytes(C, bt, H)),
    )(x_tm, w_aug, wib, bout)

    return jnp.transpose(mean_tm), jnp.transpose(lv_tm)      # (B, S) each


def ref_forward(x, w_ih, w_hh, b_ih, b_hh, w_out, b_out):
    """Pure-JAX reference mirroring the PyTorch forward."""
    B, S = x.shape
    H = w_hh.shape[0]
    x_shift = jnp.concatenate([jnp.zeros((B, 1), x.dtype), x[:, :-1]], axis=1)
    wih_row = w_ih[:, 0]

    def step(h, xt):                                          # xt: (B,)
        h_new = jnp.tanh(xt[:, None] * wih_row[None, :] + h @ w_hh.T + b_ih + b_hh)
        return h_new, h_new

    _, hs = lax.scan(step, jnp.zeros((B, H), jnp.float32), x_shift.T)  # (S, B, H)
    out = hs @ w_out.T + b_out                                # (S, B, 2)
    return out[:, :, 0].T, out[:, :, 1].T


def init_params(hidden_size, input_size=1, seed=0):
    """Deterministic init mimicking nn.RNN / nn.Linear U(-1/sqrt(H), 1/sqrt(H))."""
    H = hidden_size
    k = 1.0 / np.sqrt(H)
    keys = jax.random.split(jax.random.PRNGKey(seed), 6)
    w_ih = jax.random.uniform(keys[0], (H, input_size), jnp.float32, -k, k)
    w_hh = jax.random.uniform(keys[1], (H, H), jnp.float32, -k, k)
    b_ih = jax.random.uniform(keys[2], (H,), jnp.float32, -k, k)
    b_hh = jax.random.uniform(keys[3], (H,), jnp.float32, -k, k)
    w_out = jax.random.uniform(keys[4], (2, H), jnp.float32, -k, k)
    b_out = jax.random.uniform(keys[5], (2,), jnp.float32, -k, k)
    return w_ih, w_hh, b_ih, b_hh, w_out, b_out


if __name__ == "__main__":
    B, S, H = 2, 8, 32
    x = jax.random.normal(jax.random.PRNGKey(0), (B, S), jnp.float32)
    params = init_params(H, input_size=1, seed=0)

    mean, log_var = gaussian_rnn_forward(x, *params)
    jax.block_until_ready((mean, log_var))

    mean_ref, log_var_ref = ref_forward(x, *params)
    np.testing.assert_allclose(np.asarray(mean), np.asarray(mean_ref),
                               rtol=1e-5, atol=1e-5)
    np.testing.assert_allclose(np.asarray(log_var), np.asarray(log_var_ref),
                               rtol=1e-5, atol=1e-5)
    assert mean.shape == (B, S) and log_var.shape == (B, S)

    print("KERNEL_OK")
</pallas_src>

<mosaic_0001>
module attributes {stable_mosaic.version = 11 : i64} {
  func.func @gaussian_rnn_kernel(%arg0: i32, %arg1: i32, %arg2: memref<8x2xf32, #tpu.memory_space<vmem>>, %arg3: memref<40x32xf32, #tpu.memory_space<vmem>>, %arg4: memref<32x2xf32, #tpu.memory_space<vmem>>, %arg5: memref<2x1xf32, #tpu.memory_space<vmem>>, %arg6: memref<8x2xf32, #tpu.memory_space<vmem>>, %arg7: memref<8x2xf32, #tpu.memory_space<vmem>>, %arg8: memref<32x2xf32, #tpu.memory_space<vmem>>) attributes {dimension_semantics = [#tpu.dimension_semantics<parallel>, #tpu.dimension_semantics<arbitrary>], iteration_bounds = array<i64: 1, 1>, scalar_prefetch = 0 : i64, scratch_operands = 1 : i64, tpu.core_type = #tpu.core_type<tc>, window_params = [{transform_indices = @transform_0, window_bounds = array<i64: 8, 2>}, {pipeline_mode = #tpu.pipeline_mode<synchronous>, transform_indices = @transform_1, window_bounds = array<i64: 40, 32>}, {pipeline_mode = #tpu.pipeline_mode<synchronous>, transform_indices = @transform_2, window_bounds = array<i64: 32, 2>}, {pipeline_mode = #tpu.pipeline_mode<synchronous>, transform_indices = @transform_3, window_bounds = array<i64: 2, 1>}, {transform_indices = @transform_4, window_bounds = array<i64: 8, 2>}, {transform_indices = @transform_5, window_bounds = array<i64: 8, 2>}]} {
    %c0_i32 = arith.constant 0 : i32
    %0 = arith.cmpi eq, %arg1, %c0_i32 : i32
    %1 = arith.extui %0 : i1 to i32
    %c0_i32_0 = arith.constant 0 : i32
    %2 = arith.cmpi ne, %1, %c0_i32_0 : i32
    scf.if %2 {
      %cst_42 = arith.constant 0.000000e+00 : f32
      %180 = vector.broadcast %cst_42 : f32 to vector<32x2xf32>
      %c0_43 = arith.constant 0 : index
      %c0_44 = arith.constant 0 : index
      %181 = vector.load %arg8[%c0_43, %c0_44] : memref<32x2xf32, #tpu.memory_space<vmem>>, vector<32x2xf32>
      tpu.vector_store %arg8[%c0_43, %c0_44], %180 {strides = array<i32>} : memref<32x2xf32, #tpu.memory_space<vmem>>, vector<32x2xf32>,
    } else {
    }
    %c0 = arith.constant 0 : index
    %c0_1 = arith.constant 0 : index
    %3 = vector.load %arg3[%c0, %c0_1] : memref<40x32xf32, #tpu.memory_space<vmem>>, vector<40x32xf32>
    %c0_2 = arith.constant 0 : index
    %c0_3 = arith.constant 0 : index
    %4 = vector.load %arg4[%c0_2, %c0_3] : memref<32x2xf32, #tpu.memory_space<vmem>>, vector<32x2xf32>
    %5 = vector.extract_strided_slice %4 {offsets = [0, 0], sizes = [32, 1], strides = [1, 1]} : vector<32x2xf32> to vector<32x1xf32>
    %6 = vector.extract_strided_slice %4 {offsets = [0, 1], sizes = [32, 1], strides = [1, 1]} : vector<32x2xf32> to vector<32x1xf32>
    %c0_4 = arith.constant 0 : index
    %c0_5 = arith.constant 0 : index
    %7 = vector.load %arg5[%c0_4, %c0_5] : memref<2x1xf32, #tpu.memory_space<vmem>>, vector<2x1xf32>
    %8 = vector.extract_strided_slice %7 {offsets = [0, 0], sizes = [1, 1], strides = [1, 1]} : vector<2x1xf32> to vector<1x1xf32>
    %9 = vector.extract_strided_slice %7 {offsets = [1, 0], sizes = [1, 1], strides = [1, 1]} : vector<2x1xf32> to vector<1x1xf32>
    %c0_6 = arith.constant 0 : index
    %c0_7 = arith.constant 0 : index
    %10 = vector.load %arg8[%c0_6, %c0_7] : memref<32x2xf32, #tpu.memory_space<vmem>>, vector<32x2xf32>
    %c0_i32_8 = arith.constant 0 : i32
    %11 = arith.index_cast %c0_i32_8 : i32 to index
    %c0_9 = arith.constant 0 : index
    %12 = vector.load %arg2[%11, %c0_9] : memref<8x2xf32, #tpu.memory_space<vmem>>, vector<1x2xf32>
    %13 = vector.broadcast %5 : vector<32x1xf32> to vector<32x2xf32>
    %14 = vector.broadcast %12 : vector<1x2xf32> to vector<32x2xf32>
    %15 = arith.mulf %13, %14 : vector<32x2xf32>
    %16 = vector.broadcast %6 : vector<32x1xf32> to vector<32x2xf32>
    %17 = arith.addf %15, %16 : vector<32x2xf32>
    %18 = arith.addf %17, %10 : vector<32x2xf32>
    %19 = math.tanh %18 : vector<32x2xf32>
    %cst = arith.constant dense<0.000000e+00> : vector<40x2xf32>
    %20 = tpu.matmul %3, %19, %cst {dimension_numbers = #tpu.dot_dimension_numbers<[1], [0], [0], [1], [0, 0, 1, 1], [], []>} : vector<40x32xf32>, vector<32x2xf32>, vector<40x2xf32> -> vector<40x2xf32>
    %21 = vector.extract_strided_slice %20 {offsets = [32, 0], sizes = [1, 2], strides = [1, 1]} : vector<40x2xf32> to vector<1x2xf32>
    %22 = vector.broadcast %8 : vector<1x1xf32> to vector<1x2xf32>
    %23 = arith.addf %21, %22 : vector<1x2xf32>
    %24 = arith.index_cast %c0_i32_8 : i32 to index
    %c0_10 = arith.constant 0 : index
    %25 = vector.load %arg6[%24, %c0_10] : memref<8x2xf32, #tpu.memory_space<vmem>>, vector<1x2xf32>
    tpu.vector_store %arg6[%24, %c0_10], %23 {strides = array<i32>} : memref<8x2xf32, #tpu.memory_space<vmem>>, vector<1x2xf32>,
    %26 = vector.extract_strided_slice %20 {offsets = [33, 0], sizes = [1, 2], strides = [1, 1]} : vector<40x2xf32> to vector<1x2xf32>
    %27 = vector.broadcast %9 : vector<1x1xf32> to vector<1x2xf32>
    %28 = arith.addf %26, %27 : vector<1x2xf32>
    %29 = arith.index_cast %c0_i32_8 : i32 to index
    %c0_11 = arith.constant 0 : index
    %30 = vector.load %arg7[%29, %c0_11] : memref<8x2xf32, #tpu.memory_space<vmem>>, vector<1x2xf32>
    tpu.vector_store %arg7[%29, %c0_11], %28 {strides = array<i32>} : memref<8x2xf32, #tpu.memory_space<vmem>>, vector<1x2xf32>,
    %31 = vector.extract_strided_slice %20 {offsets = [0, 0], sizes = [32, 2], strides = [1, 1]} : vector<40x2xf32> to vector<32x2xf32>
    %c1_i32 = arith.constant 1 : i32
    %32 = arith.index_cast %c1_i32 : i32 to index
    %c0_12 = arith.constant 0 : index
    %33 = vector.load %arg2[%32, %c0_12] : memref<8x2xf32, #tpu.memory_space<vmem>>, vector<1x2xf32>
    %34 = vector.broadcast %5 : vector<32x1xf32> to vector<32x2xf32>
    %35 = vector.broadcast %33 : vector<1x2xf32> to vector<32x2xf32>
    %36 = arith.mulf %34, %35 : vector<32x2xf32>
    %37 = vector.broadcast %6 : vector<32x1xf32> to vector<32x2xf32>
    %38 = arith.addf %36, %37 : vector<32x2xf32>
    %39 = arith.addf %38, %31 : vector<32x2xf32>
    %40 = math.tanh %39 : vector<32x2xf32>
    %cst_13 = arith.constant dense<0.000000e+00> : vector<40x2xf32>
    %41 = tpu.matmul %3, %40, %cst_13 {dimension_numbers = #tpu.dot_dimension_numbers<[1], [0], [0], [1], [0, 0, 1, 1], [], []>} : vector<40x32xf32>, vector<32x2xf32>, vector<40x2xf32> -> vector<40x2xf32>
    %42 = vector.extract_strided_slice %41 {offsets = [32, 0], sizes = [1, 2], strides = [1, 1]} : vector<40x2xf32> to vector<1x2xf32>
    %43 = vector.broadcast %8 : vector<1x1xf32> to vector<1x2xf32>
    %44 = arith.addf %42, %43 : vector<1x2xf32>
    %45 = arith.index_cast %c1_i32 : i32 to index
    %c0_14 = arith.constant 0 : index
    %46 = vector.load %arg6[%45, %c0_14] : memref<8x2xf32, #tpu.memory_space<vmem>>, vector<1x2xf32>
    tpu.vector_store %arg6[%45, %c0_14], %44 {strides = array<i32>} : memref<8x2xf32, #tpu.memory_space<vmem>>, vector<1x2xf32>,
    %47 = vector.extract_strided_slice %41 {offsets = [33, 0], sizes = [1, 2], strides = [1, 1]} : vector<40x2xf32> to vector<1x2xf32>
    %48 = vector.broadcast %9 : vector<1x1xf32> to vector<1x2xf32>
    %49 = arith.addf %47, %48 : vector<1x2xf32>
    %50 = arith.index_cast %c1_i32 : i32 to index
    %c0_15 = arith.constant 0 : index
    %51 = vector.load %arg7[%50, %c0_15] : memref<8x2xf32, #tpu.memory_space<vmem>>, vector<1x2xf32>
    tpu.vector_store %arg7[%50, %c0_15], %49 {strides = array<i32>} : memref<8x2xf32, #tpu.memory_space<vmem>>, vector<1x2xf32>,
    %52 = vector.extract_strided_slice %41 {offsets = [0, 0], sizes = [32, 2], strides = [1, 1]} : vector<40x2xf32> to vector<32x2xf32>
    %c2_i32 = arith.constant 2 : i32
    %53 = arith.index_cast %c2_i32 : i32 to index
    %c0_16 = arith.constant 0 : index
    %54 = vector.load %arg2[%53, %c0_16] : memref<8x2xf32, #tpu.memory_space<vmem>>, vector<1x2xf32>
    %55 = vector.broadcast %5 : vector<32x1xf32> to vector<32x2xf32>
    %56 = vector.broadcast %54 : vector<1x2xf32> to vector<32x2xf32>
    %57 = arith.mulf %55, %56 : vector<32x2xf32>
    %58 = vector.broadcast %6 : vector<32x1xf32> to vector<32x2xf32>
    %59 = arith.addf %57, %58 : vector<32x2xf32>
    %60 = arith.addf %59, %52 : vector<32x2xf32>
    %61 = math.tanh %60 : vector<32x2xf32>
    %cst_17 = arith.constant dense<0.000000e+00> : vector<40x2xf32>
    %62 = tpu.matmul %3, %61, %cst_17 {dimension_numbers = #tpu.dot_dimension_numbers<[1], [0], [0], [1], [0, 0, 1, 1], [], []>} : vector<40x32xf32>, vector<32x2xf32>, vector<40x2xf32> -> vector<40x2xf32>
    %63 = vector.extract_strided_slice %62 {offsets = [32, 0], sizes = [1, 2], strides = [1, 1]} : vector<40x2xf32> to vector<1x2xf32>
    %64 = vector.broadcast %8 : vector<1x1xf32> to vector<1x2xf32>
    %65 = arith.addf %63, %64 : vector<1x2xf32>
    %66 = arith.index_cast %c2_i32 : i32 to index
    %c0_18 = arith.constant 0 : index
    %67 = vector.load %arg6[%66, %c0_18] : memref<8x2xf32, #tpu.memory_space<vmem>>, vector<1x2xf32>
    tpu.vector_store %arg6[%66, %c0_18], %65 {strides = array<i32>} : memref<8x2xf32, #tpu.memory_space<vmem>>, vector<1x2xf32>,
    %68 = vector.extract_strided_slice %62 {offsets = [33, 0], sizes = [1, 2], strides = [1, 1]} : vector<40x2xf32> to vector<1x2xf32>
    %69 = vector.broadcast %9 : vector<1x1xf32> to vector<1x2xf32>
    %70 = arith.addf %68, %69 : vector<1x2xf32>
    %71 = arith.index_cast %c2_i32 : i32 to index
    %c0_19 = arith.constant 0 : index
    %72 = vector.load %arg7[%71, %c0_19] : memref<8x2xf32, #tpu.memory_space<vmem>>, vector<1x2xf32>
    tpu.vector_store %arg7[%71, %c0_19], %70 {strides = array<i32>} : memref<8x2xf32, #tpu.memory_space<vmem>>, vector<1x2xf32>,
    %73 = vector.extract_strided_slice %62 {offsets = [0, 0], sizes = [32, 2], strides = [1, 1]} : vector<40x2xf32> to vector<32x2xf32>
    %c3_i32 = arith.constant 3 : i32
    %74 = arith.index_cast %c3_i32 : i32 to index
    %c0_20 = arith.constant 0 : index
    %75 = vector.load %arg2[%74, %c0_20] : memref<8x2xf32, #tpu.memory_space<vmem>>, vector<1x2xf32>
    %76 = vector.broadcast %5 : vector<32x1xf32> to vector<32x2xf32>
    %77 = vector.broadcast %75 : vector<1x2xf32> to vector<32x2xf32>
    %78 = arith.mulf %76, %77 : vector<32x2xf32>
    %79 = vector.broadcast %6 : vector<32x1xf32> to vector<32x2xf32>
    %80 = arith.addf %78, %79 : vector<32x2xf32>
    %81 = arith.addf %80, %73 : vector<32x2xf32>
    %82 = math.tanh %81 : vector<32x2xf32>
    %cst_21 = arith.constant dense<0.000000e+00> : vector<40x2xf32>
    %83 = tpu.matmul %3, %82, %cst_21 {dimension_numbers = #tpu.dot_dimension_numbers<[1], [0], [0], [1], [0, 0, 1, 1], [], []>} : vector<40x32xf32>, vector<32x2xf32>, vector<40x2xf32> -> vector<40x2xf32>
    %84 = vector.extract_strided_slice %83 {offsets = [32, 0], sizes = [1, 2], strides = [1, 1]} : vector<40x2xf32> to vector<1x2xf32>
    %85 = vector.broadcast %8 : vector<1x1xf32> to vector<1x2xf32>
    %86 = arith.addf %84, %85 : vector<1x2xf32>
    %87 = arith.index_cast %c3_i32 : i32 to index
    %c0_22 = arith.constant 0 : index
    %88 = vector.load %arg6[%87, %c0_22] : memref<8x2xf32, #tpu.memory_space<vmem>>, vector<1x2xf32>
    tpu.vector_store %arg6[%87, %c0_22], %86 {strides = array<i32>} : memref<8x2xf32, #tpu.memory_space<vmem>>, vector<1x2xf32>,
    %89 = vector.extract_strided_slice %83 {offsets = [33, 0], sizes = [1, 2], strides = [1, 1]} : vector<40x2xf32> to vector<1x2xf32>
    %90 = vector.broadcast %9 : vector<1x1xf32> to vector<1x2xf32>
    %91 = arith.addf %89, %90 : vector<1x2xf32>
    %92 = arith.index_cast %c3_i32 : i32 to index
    %c0_23 = arith.constant 0 : index
    %93 = vector.load %arg7[%92, %c0_23] : memref<8x2xf32, #tpu.memory_space<vmem>>, vector<1x2xf32>
    tpu.vector_store %arg7[%92, %c0_23], %91 {strides = array<i32>} : memref<8x2xf32, #tpu.memory_space<vmem>>, vector<1x2xf32>,
    %94 = vector.extract_strided_slice %83 {offsets = [0, 0], sizes = [32, 2], strides = [1, 1]} : vector<40x2xf32> to vector<32x2xf32>
    %c4_i32 = arith.constant 4 : i32
    %95 = arith.index_cast %c4_i32 : i32 to index
    %c0_24 = arith.constant 0 : index
    %96 = vector.load %arg2[%95, %c0_24] : memref<8x2xf32, #tpu.memory_space<vmem>>, vector<1x2xf32>
    %97 = vector.broadcast %5 : vector<32x1xf32> to vector<32x2xf32>
    %98 = vector.broadcast %96 : vector<1x2xf32> to vector<32x2xf32>
    %99 = arith.mulf %97, %98 : vector<32x2xf32>
    %100 = vector.broadcast %6 : vector<32x1xf32> to vector<32x2xf32>
    %101 = arith.addf %99, %100 : vector<32x2xf32>
    %102 = arith.addf %101, %94 : vector<32x2xf32>
    %103 = math.tanh %102 : vector<32x2xf32>
    %cst_25 = arith.constant dense<0.000000e+00> : vector<40x2xf32>
    %104 = tpu.matmul %3, %103, %cst_25 {dimension_numbers = #tpu.dot_dimension_numbers<[1], [0], [0], [1], [0, 0, 1, 1], [], []>} : vector<40x32xf32>, vector<32x2xf32>, vector<40x2xf32> -> vector<40x2xf32>
    %105 = vector.extract_strided_slice %104 {offsets = [32, 0], sizes = [1, 2], strides = [1, 1]} : vector<40x2xf32> to vector<1x2xf32>
    %106 = vector.broadcast %8 : vector<1x1xf32> to vector<1x2xf32>
    %107 = arith.addf %105, %106 : vector<1x2xf32>
    %108 = arith.index_cast %c4_i32 : i32 to index
    %c0_26 = arith.constant 0 : index
    %109 = vector.load %arg6[%108, %c0_26] : memref<8x2xf32, #tpu.memory_space<vmem>>, vector<1x2xf32>
    tpu.vector_store %arg6[%108, %c0_26], %107 {strides = array<i32>} : memref<8x2xf32, #tpu.memory_space<vmem>>, vector<1x2xf32>,
    %110 = vector.extract_strided_slice %104 {offsets = [33, 0], sizes = [1, 2], strides = [1, 1]} : vector<40x2xf32> to vector<1x2xf32>
    %111 = vector.broadcast %9 : vector<1x1xf32> to vector<1x2xf32>
    %112 = arith.addf %110, %111 : vector<1x2xf32>
    %113 = arith.index_cast %c4_i32 : i32 to index
    %c0_27 = arith.constant 0 : index
    %114 = vector.load %arg7[%113, %c0_27] : memref<8x2xf32, #tpu.memory_space<vmem>>, vector<1x2xf32>
    tpu.vector_store %arg7[%113, %c0_27], %112 {strides = array<i32>} : memref<8x2xf32, #tpu.memory_space<vmem>>, vector<1x2xf32>,
    %115 = vector.extract_strided_slice %104 {offsets = [0, 0], sizes = [32, 2], strides = [1, 1]} : vector<40x2xf32> to vector<32x2xf32>
    %c5_i32 = arith.constant 5 : i32
    %116 = arith.index_cast %c5_i32 : i32 to index
    %c0_28 = arith.constant 0 : index
    %117 = vector.load %arg2[%116, %c0_28] : memref<8x2xf32, #tpu.memory_space<vmem>>, vector<1x2xf32>
    %118 = vector.broadcast %5 : vector<32x1xf32> to vector<32x2xf32>
    %119 = vector.broadcast %117 : vector<1x2xf32> to vector<32x2xf32>
    %120 = arith.mulf %118, %119 : vector<32x2xf32>
    %121 = vector.broadcast %6 : vector<32x1xf32> to vector<32x2xf32>
    %122 = arith.addf %120, %121 : vector<32x2xf32>
    %123 = arith.addf %122, %115 : vector<32x2xf32>
    %124 = math.tanh %123 : vector<32x2xf32>
    %cst_29 = arith.constant dense<0.000000e+00> : vector<40x2xf32>
    %125 = tpu.matmul %3, %124, %cst_29 {dimension_numbers = #tpu.dot_dimension_numbers<[1], [0], [0], [1], [0, 0, 1, 1], [], []>} : vector<40x32xf32>, vector<32x2xf32>, vector<40x2xf32> -> vector<40x2xf32>
    %126 = vector.extract_strided_slice %125 {offsets = [32, 0], sizes = [1, 2], strides = [1, 1]} : vector<40x2xf32> to vector<1x2xf32>
    %127 = vector.broadcast %8 : vector<1x1xf32> to vector<1x2xf32>
    %128 = arith.addf %126, %127 : vector<1x2xf32>
    %129 = arith.index_cast %c5_i32 : i32 to index
    %c0_30 = arith.constant 0 : index
    %130 = vector.load %arg6[%129, %c0_30] : memref<8x2xf32, #tpu.memory_space<vmem>>, vector<1x2xf32>
    tpu.vector_store %arg6[%129, %c0_30], %128 {strides = array<i32>} : memref<8x2xf32, #tpu.memory_space<vmem>>, vector<1x2xf32>,
    %131 = vector.extract_strided_slice %125 {offsets = [33, 0], sizes = [1, 2], strides = [1, 1]} : vector<40x2xf32> to vector<1x2xf32>
    %132 = vector.broadcast %9 : vector<1x1xf32> to vector<1x2xf32>
    %133 = arith.addf %131, %132 : vector<1x2xf32>
    %134 = arith.index_cast %c5_i32 : i32 to index
    %c0_31 = arith.constant 0 : index
    %135 = vector.load %arg7[%134, %c0_31] : memref<8x2xf32, #tpu.memory_space<vmem>>, vector<1x2xf32>
    tpu.vector_store %arg7[%134, %c0_31], %133 {strides = array<i32>} : memref<8x2xf32, #tpu.memory_space<vmem>>, vector<1x2xf32>,
    %136 = vector.extract_strided_slice %125 {offsets = [0, 0], sizes = [32, 2], strides = [1, 1]} : vector<40x2xf32> to vector<32x2xf32>
    %c6_i32 = arith.constant 6 : i32
    %137 = arith.index_cast %c6_i32 : i32 to index
    %c0_32 = arith.constant 0 : index
    %138 = vector.load %arg2[%137, %c0_32] : memref<8x2xf32, #tpu.memory_space<vmem>>, vector<1x2xf32>
    %139 = vector.broadcast %5 : vector<32x1xf32> to vector<32x2xf32>
    %140 = vector.broadcast %138 : vector<1x2xf32> to vector<32x2xf32>
    %141 = arith.mulf %139, %140 : vector<32x2xf32>
    %142 = vector.broadcast %6 : vector<32x1xf32> to vector<32x2xf32>
    %143 = arith.addf %141, %142 : vector<32x2xf32>
    %144 = arith.addf %143, %136 : vector<32x2xf32>
    %145 = math.tanh %144 : vector<32x2xf32>
    %cst_33 = arith.constant dense<0.000000e+00> : vector<40x2xf32>
    %146 = tpu.matmul %3, %145, %cst_33 {dimension_numbers = #tpu.dot_dimension_numbers<[1], [0], [0], [1], [0, 0, 1, 1], [], []>} : vector<40x32xf32>, vector<32x2xf32>, vector<40x2xf32> -> vector<40x2xf32>
    %147 = vector.extract_strided_slice %146 {offsets = [32, 0], sizes = [1, 2], strides = [1, 1]} : vector<40x2xf32> to vector<1x2xf32>
    %148 = vector.broadcast %8 : vector<1x1xf32> to vector<1x2xf32>
    %149 = arith.addf %147, %148 : vector<1x2xf32>
    %150 = arith.index_cast %c6_i32 : i32 to index
    %c0_34 = arith.constant 0 : index
    %151 = vector.load %arg6[%150, %c0_34] : memref<8x2xf32, #tpu.memory_space<vmem>>, vector<1x2xf32>
    tpu.vector_store %arg6[%150, %c0_34], %149 {strides = array<i32>} : memref<8x2xf32, #tpu.memory_space<vmem>>, vector<1x2xf32>,
    %152 = vector.extract_strided_slice %146 {offsets = [33, 0], sizes = [1, 2], strides = [1, 1]} : vector<40x2xf32> to vector<1x2xf32>
    %153 = vector.broadcast %9 : vector<1x1xf32> to vector<1x2xf32>
    %154 = arith.addf %152, %153 : vector<1x2xf32>
    %155 = arith.index_cast %c6_i32 : i32 to index
    %c0_35 = arith.constant 0 : index
    %156 = vector.load %arg7[%155, %c0_35] : memref<8x2xf32, #tpu.memory_space<vmem>>, vector<1x2xf32>
    tpu.vector_store %arg7[%155, %c0_35], %154 {strides = array<i32>} : memref<8x2xf32, #tpu.memory_space<vmem>>, vector<1x2xf32>,
    %157 = vector.extract_strided_slice %146 {offsets = [0, 0], sizes = [32, 2], strides = [1, 1]} : vector<40x2xf32> to vector<32x2xf32>
    %c7_i32 = arith.constant 7 : i32
    %158 = arith.index_cast %c7_i32 : i32 to index
    %c0_36 = arith.constant 0 : index
    %159 = vector.load %arg2[%158, %c0_36] : memref<8x2xf32, #tpu.memory_space<vmem>>, vector<1x2xf32>
    %160 = vector.broadcast %5 : vector<32x1xf32> to vector<32x2xf32>
    %161 = vector.broadcast %159 : vector<1x2xf32> to vector<32x2xf32>
    %162 = arith.mulf %160, %161 : vector<32x2xf32>
    %163 = vector.broadcast %6 : vector<32x1xf32> to vector<32x2xf32>
    %164 = arith.addf %162, %163 : vector<32x2xf32>
    %165 = arith.addf %164, %157 : vector<32x2xf32>
    %166 = math.tanh %165 : vector<32x2xf32>
    %cst_37 = arith.constant dense<0.000000e+00> : vector<40x2xf32>
    %167 = tpu.matmul %3, %166, %cst_37 {dimension_numbers = #tpu.dot_dimension_numbers<[1], [0], [0], [1], [0, 0, 1, 1], [], []>} : vector<40x32xf32>, vector<32x2xf32>, vector<40x2xf32> -> vector<40x2xf32>
    %168 = vector.extract_strided_slice %167 {offsets = [32, 0], sizes = [1, 2], strides = [1, 1]} : vector<40x2xf32> to vector<1x2xf32>
    %169 = vector.broadcast %8 : vector<1x1xf32> to vector<1x2xf32>
    %170 = arith.addf %168, %169 : vector<1x2xf32>
    %171 = arith.index_cast %c7_i32 : i32 to index
    %c0_38 = arith.constant 0 : index
    %172 = vector.load %arg6[%171, %c0_38] : memref<8x2xf32, #tpu.memory_space<vmem>>, vector<1x2xf32>
    tpu.vector_store %arg6[%171, %c0_38], %170 {strides = array<i32>} : memref<8x2xf32, #tpu.memory_space<vmem>>, vector<1x2xf32>,
    %173 = vector.extract_strided_slice %167 {offsets = [33, 0], sizes = [1, 2], strides = [1, 1]} : vector<40x2xf32> to vector<1x2xf32>
    %174 = vector.broadcast %9 : vector<1x1xf32> to vector<1x2xf32>
    %175 = arith.addf %173, %174 : vector<1x2xf32>
    %176 = arith.index_cast %c7_i32 : i32 to index
    %c0_39 = arith.constant 0 : index
    %177 = vector.load %arg7[%176, %c0_39] : memref<8x2xf32, #tpu.memory_space<vmem>>, vector<1x2xf32>
    tpu.vector_store %arg7[%176, %c0_39], %175 {strides = array<i32>} : memref<8x2xf32, #tpu.memory_space<vmem>>, vector<1x2xf32>,
    %178 = vector.extract_strided_slice %167 {offsets = [0, 0], sizes = [32, 2], strides = [1, 1]} : vector<40x2xf32> to vector<32x2xf32>
    %c8_i32 = arith.constant 8 : i32
    %c0_40 = arith.constant 0 : index
    %c0_41 = arith.constant 0 : index
    %179 = vector.load %arg8[%c0_40, %c0_41] : memref<32x2xf32, #tpu.memory_space<vmem>>, vector<32x2xf32>
    tpu.vector_store %arg8[%c0_40, %c0_41], %178 {strides = array<i32>} : memref<32x2xf32, #tpu.memory_space<vmem>>, vector<32x2xf32>,
    return
  }
  func.func @transform_0(%arg0: i32, %arg1: i32) -> (i32, i32) {
    %c0_i32 = arith.constant 0 : i32
    return %arg1, %arg0 : i32, i32
  }
  func.func @transform_1(%arg0: i32, %arg1: i32) -> (i32, i32) {
    %c0_i32 = arith.constant 0 : i32
    %c0_i32_0 = arith.constant 0 : i32
    %c0_i32_1 = arith.constant 0 : i32
    return %c0_i32, %c0_i32_0 : i32, i32
  }
  func.func @transform_2(%arg0: i32, %arg1: i32) -> (i32, i32) {
    %c0_i32 = arith.constant 0 : i32
    %c0_i32_0 = arith.constant 0 : i32
    %c0_i32_1 = arith.constant 0 : i32
    return %c0_i32, %c0_i32_0 : i32, i32
  }
  func.func @transform_3(%arg0: i32, %arg1: i32) -> (i32, i32) {
    %c0_i32 = arith.constant 0 : i32
    %c0_i32_0 = arith.constant 0 : i32
    %c0_i32_1 = arith.constant 0 : i32
    return %c0_i32, %c0_i32_0 : i32, i32
  }
  func.func @transform_4(%arg0: i32, %arg1: i32) -> (i32, i32) {
    %c0_i32 = arith.constant 0 : i32
    return %arg1, %arg0 : i32, i32
  }
  func.func @transform_5(%arg0: i32, %arg1: i32) -> (i32, i32) {
    %c0_i32 = arith.constant 0 : i32
    return %arg1, %arg0 : i32, i32
  }
}

</mosaic_0001>

<llo_original>
// kernel: gaussian_rnn_forward.1
$region0: #{gaussian_rnn_forward.1}
  #allocation0 [shape = 'u32[]', space=smem, size = 0x4, offset = 0x4, fixed_abs, tag = 'smem constant byte address 0x4 - core index']
  #allocation1 [shape = 'u32[144,128]{1,0:T(1,128)}', space=vmem, size = 0x12000, scoped, tag = 'internal scratch']
  #allocation2 [shape = 'f32[32,2]{1,0:T(8,128)}', space=vmem, size = 0x4000, scoped, tag = 'scratch operand']
  %s0 = inlined_call_operand.vmem [shape: f32[8,2], index: 0, kind: input, shape index: {}]
  %s1 = inlined_call_operand.vmem [shape: f32[40,32], index: 1, kind: input, shape index: {}]
  %s2 = inlined_call_operand.vmem [shape: f32[32,2], index: 2, kind: input, shape index: {}]
  %s3 = inlined_call_operand.vmem [shape: f32[2,1], index: 3, kind: input, shape index: {}]
  %s4 = inlined_call_operand.vmem [shape: f32[8,2], index: 4, kind: output, shape index: {0}]
  %s5 = inlined_call_operand.vmem [shape: f32[8,2], index: 5, kind: output, shape index: {1}]
  %6 = xla_tuple %s4, %s5
  %s7 = sld [smem:[#allocation0]]
  $region38: #{gaussian_rnn_forward.1} parent=0
    _
  %s9 = ssub.s32 1, %s7
  %s10 = scalar_select 0, %s9, %s7
  // Predicated region
  $region2: #{gaussian_rnn_forward.1} parent=0 // pred_check
    _
  $region3: #{gaussian_rnn_forward.1} parent=0 // pred_check_branch
    %12 = sbr.rel (0) target = $region5
  $region4: #{gaussian_rnn_forward.1} parent=0 // pred_region
    _
  $region5: #{gaussian_rnn_forward.1} parent=0 // pred_fallthru
    _
  // Predicated region
  $region6: #{gaussian_rnn_forward.1} parent=0 // pred_check
    _
  $region7: #{gaussian_rnn_forward.1} parent=0 // pred_check_branch
    %14 = sbr.rel (0) target = $region9
  $region8: #{gaussian_rnn_forward.1} parent=0 // pred_region
    _
  $region9: #{gaussian_rnn_forward.1} parent=0 // pred_fallthru
    _
  // Predicated region
  $region10: #{gaussian_rnn_forward.1} parent=0 // pred_check
    _
  $region11: #{gaussian_rnn_forward.1} parent=0 // pred_check_branch
    %16 = sbr.rel (0) target = $region13
  $region12: #{gaussian_rnn_forward.1} parent=0 // pred_region
    _
  $region13: #{gaussian_rnn_forward.1} parent=0 // pred_fallthru
    _
  // Predicated region
  $region14: #{gaussian_rnn_forward.1} parent=0 // pred_check
    _
  $region15: #{gaussian_rnn_forward.1} parent=0 // pred_check_branch
    %18 = sbr.rel (0) target = $region17
  $region16: #{gaussian_rnn_forward.1} parent=0 // pred_region
    _
  $region17: #{gaussian_rnn_forward.1} parent=0 // pred_fallthru
    _
  %p19 = scmp.eq.s32.totalorder 0, 0
  // Predicated region
  $region18: #{gaussian_rnn_forward.1} parent=0 // pred_check
    %p20 = pneg %p19
  $region19: #{gaussian_rnn_forward.1} parent=0 // pred_check_branch
    %22 = sbr.rel (%p20) target = $region21
  $region20: #{gaussian_rnn_forward.1} parent=0 // pred_region
    %vm23 = vcmask 15360
    %24 = vst.msk [vmem:[#allocation2] sm:$0xff] %vm23, 0.0
    %25 = vst.msk [vmem:[#allocation2 + $0x8] sm:$0xff] %vm23, 0.0
    %26 = vst.msk [vmem:[#allocation2 + $0x10] sm:$0xff] %vm23, 0.0
    %27 = vst.msk [vmem:[#allocation2 + $0x18] sm:$0xff] %vm23, 0.0
  $region21: #{gaussian_rnn_forward.1} parent=0 // pred_fallthru
    _
  %v28 = vld [vmem:[%s1] sm:$0xff]
  %v29 = vld [vmem:[%s1 + $0x8] sm:$0xff]
  %v30 = vld [vmem:[%s1 + $0x10] sm:$0xff]
  %v31 = vld [vmem:[%s1 + $0x18] sm:$0xff]
  %v32 = vld [vmem:[%s1 + $0x20] sm:$0xff]
  %v33 = vld [vmem:[%s2] sm:$0xff]
  %v34 = vld [vmem:[%s2 + $0x8] sm:$0xff]
  %v35 = vld [vmem:[%s2 + $0x10] sm:$0xff]
  %v36 = vld [vmem:[%s2 + $0x18] sm:$0xff]
  %v37 = vld [vmem:[%s3] sm:$0x3]
  %v38 = vld [vmem:[#allocation2] sm:$0xff]
  %v39 = vld [vmem:[#allocation2 + $0x8] sm:$0xff]
  %v40 = vld [vmem:[#allocation2 + $0x10] sm:$0xff]
  %v41 = vld [vmem:[#allocation2 + $0x18] sm:$0xff]
  %v42 = vld [vmem:[%s0] sm:$0x1]
  %44 = vset.pattern.permute.xlu0 0
  %45 = vperm.xlu0 %44, %v33
  %v46 = vpop.permute.xlu0 %45
  %49 = vset.pattern.permute.xlu0 0
  %50 = vperm.xlu0 %49, %v34
  %v51 = vpop.permute.xlu0 %50
  %54 = vset.pattern.permute.xlu0 0
  %55 = vperm.xlu0 %54, %v35
  %v56 = vpop.permute.xlu0 %55
  %59 = vset.pattern.permute.xlu0 0
  %60 = vperm.xlu0 %59, %v36
  %v61 = vpop.permute.xlu0 %60
  %v63 = vlaneseq
  %v64 = vshrl.u32 %v63, 7
  %v65 = vsub.s32 0, %v64
  %v66 = vrot.slane %v42, %v65
  %v67 = vmul.f32 %v46, %v66
  %v68 = vmul.f32 %v51, %v66
  %v69 = vmul.f32 %v56, %v66
  %v70 = vmul.f32 %v61, %v66
  %71 = vset.pattern.permute.xlu0 1
  %72 = vperm.xlu0 %71, %v33
  %v73 = vpop.permute.xlu0 %72
  %75 = vset.pattern.permute.xlu0 1
  %76 = vperm.xlu0 %75, %v34
  %v77 = vpop.permute.xlu0 %76
  %79 = vset.pattern.permute.xlu0 1
  %80 = vperm.xlu0 %79, %v35
  %v81 = vpop.permute.xlu0 %80
  %83 = vset.pattern.permute.xlu0 1
  %84 = vperm.xlu0 %83, %v36
  %v85 = vpop.permute.xlu0 %84
  %v87 = vadd.f32 %v67, %v73
  %v88 = vadd.f32 %v68, %v77
  %v89 = vadd.f32 %v69, %v81
  %v90 = vadd.f32 %v70, %v85
  %v91 = vadd.f32 %v87, %v38
  %v92 = vadd.f32 %v88, %v39
  %v93 = vadd.f32 %v89, %v40
  %v94 = vadd.f32 %v90, %v41
  %v95 = vtanh.pop %v91
  %v96 = vtanh.pop %v92
  %v97 = vtanh.pop %v93
  %v98 = vtanh.pop %v94
  %vm99 = vcmask 261120
  %v101 = vsel %vm99, %v28, 0
  %v104 = vsel %vm99, %v29, 0
  %v107 = vsel %vm99, %v30, 0
  %v110 = vsel %vm99, %v31, 0
  %v113 = vsel %vm99, %v32, 0
  %115 = vmatprep.subr.mxu0 0.0
  %116 = vmatpush1.msra.mxu0 %v95
  %117 = vmatprep.subr.mxu0 0.0
  %118 = vmatpush1.msra.mxu0 %v96
  %119 = vmatprep.subr.mxu0 0.0
  %120 = vmatpush1.msra.mxu0 %v97
  %121 = vmatprep.subr.mxu0 0.0
  %122 = vmatpush1.msra.mxu0 %v98
  %123 = vmatprep.subr.mxu0 0.0
  %124 = vmatpush1.msra.mxu0 0.0
  %125 = vmatprep.subr.mxu0 0.0
  %126 = vmatpush1.msra.mxu0 0.0
  %127 = vmatprep.subr.mxu0 0.0
  %128 = vmatpush1.msra.mxu0 0.0
  %129 = vmatprep.subr.mxu0 0.0
  %130 = vmatpush1.msra.mxu0 0.0
  %131 = vmatprep.subr.mxu0 0.0
  %132 = vmatpush1.msra.mxu0 0.0
  %133 = vmatprep.subr.mxu0 0.0
  %134 = vmatpush1.msra.mxu0 0.0
  %135 = vmatprep.subr.mxu0 0.0
  %136 = vmatpush1.msra.mxu0 0.0
  %137 = vmatprep.subr.mxu0 0.0
  %138 = vmatpush1.msra.mxu0 0.0
  %139 = vmatprep.subr.mxu0 0.0
  %140 = vmatpush1.msra.mxu0 0.0
  %141 = vmatprep.subr.mxu0 0.0
  %142 = vmatpush1.msra.mxu0 0.0
  %143 = vmatprep.subr.mxu0 0.0
  %144 = vmatpush1.msra.mxu0 0.0
  %145 = vmatprep.subr.mxu0 0.0
  %146 = vmatpush1.msra.mxu0 0.0
  %147 = vmatprep.subr.mxu0 0.0
  %148 = vmatpush1.msra.mxu0 0.0
  %149 = vmatprep.subr.mxu0 0.0
  %150 = vmatpush1.msra.mxu0 0.0
  %151 = vmatprep.subr.mxu0 0.0
  %152 = vmatpush1.msra.mxu0 0.0
  %153 = vmatprep.subr.mxu0 0.0
  %154 = vmatpush1.msra.mxu0 0.0
  %155 = vmatprep.subr.mxu0 0.0
  %156 = vmatpush1.msra.mxu0 0.0
  %157 = vmatprep.subr.mxu0 0.0
  %158 = vmatpush1.msra.mxu0 0.0
  %159 = vmatprep.subr.mxu0 0.0
  %160 = vmatpush1.msra.mxu0 0.0
  %161 = vmatprep.subr.mxu0 0.0
  %162 = vmatpush1.msra.mxu0 0.0
  %163 = vmatprep.subr.mxu0 0.0
  %164 = vmatpush1.msra.mxu0 0.0
  %165 = vmatprep.subr.mxu0 0.0
  %166 = vmatpush1.msra.mxu0 0.0
  %167 = vmatprep.subr.mxu0 0.0
  %168 = vmatpush1.msra.mxu0 0.0
  %169 = vmatprep.subr.mxu0 0.0
  %170 = vmatpush1.msra.mxu0 0.0
  %171 = vmatprep.subr.mxu0 0.0
  %172 = vmatpush1.msra.mxu0 0.0
  %173 = vmatprep.subr.mxu0 0.0
  %174 = vmatpush1.msra.mxu0 0.0
  %175 = vmatprep.subr.mxu0 0.0
  %176 = vmatpush1.msra.mxu0 0.0
  %177 = vmatprep.subr.mxu0 0.0
  %178 = vmatpush1.msra.mxu0 0.0
  %179 = vmatprep.mubr.f32.mxu0 0.0
  %180 = vmatmul.mubr.f32.gmra.mrb[0].mxu0 %v101
  %v181 = vpop.f32.mrb[0].mxu0
  %v182 = vadd.f32 0.0, %v181
  %v183 = vpop.f32.mrb[0].mxu0
  %184 = vmatprep.mubr.f32.mxu0 0.0
  %185 = vmatmul.mubr.f32.gmra.mrb[0].mxu0 %v104
  %v186 = vpop.f32.mrb[0].mxu0
  %v187 = vadd.f32 0.0, %v186
  %v188 = vpop.f32.mrb[0].mxu0
  %189 = vmatprep.mubr.f32.mxu0 0.0
  %190 = vmatmul.mubr.f32.gmra.mrb[0].mxu0 %v107
  %v191 = vpop.f32.mrb[0].mxu0
  %v192 = vadd.f32 0.0, %v191
  %v193 = vpop.f32.mrb[0].mxu0
  %194 = vmatprep.mubr.f32.mxu0 0.0
  %195 = vmatmul.mubr.f32.gmra.mrb[0].mxu0 %v110
  %v196 = vpop.f32.mrb[0].mxu0
  %v197 = vadd.f32 0.0, %v196
  %v198 = vpop.f32.mrb[0].mxu0
  %199 = vmatprep.mubr.f32.mxu0 0.0
  %200 = vmatmul.mubr.f32.gmra.mrb[0].mxu0 %v113
  %v201 = vpop.f32.mrb[0].mxu0
  %v202 = vadd.f32 0.0, %v201
  %v203 = vpop.f32.mrb[0].mxu0
  %204 = vdwg.mxu0
  %206 = vset.pattern.permute.xlu0 0
  %207 = vperm.xlu0 %206, %v37
  %v208 = vpop.permute.xlu0 %207
  %v210 = vadd.f32 %v202, %v208
  %vm211 = vcmask 8192
  %212 = vst.msk [vmem:[%s4] sm:$0x1] %vm211, %v210
  %vm213 = vcmask 9217
  %214 = vst.msk [vmem:[%s5 - $0x1] sm:$0x2] %vm213, %v210
  %v215 = vld [vmem:[%s0 + $0x1] sm:$0x1]
  %v216 = vlaneseq
  %v217 = vshrl.u32 %v216, 7
  %v218 = vsub.s32 0, %v217
  %v219 = vrot.slane %v215, %v218
  %v220 = vmul.f32 %v46, %v219
  %v221 = vmul.f32 %v51, %v219
  %v222 = vmul.f32 %v56, %v219
  %v223 = vmul.f32 %v61, %v219
  %v224 = vadd.f32 %v220, %v73
  %v225 = vadd.f32 %v221, %v77
  %v226 = vadd.f32 %v222, %v81
  %v227 = vadd.f32 %v223, %v85
  %v228 = vadd.f32 %v224, %v182
  %v229 = vadd.f32 %v225, %v187
  %v230 = vadd.f32 %v226, %v192
  %v231 = vadd.f32 %v227, %v197
  %v232 = vtanh.pop %v228
  %v233 = vtanh.pop %v229
  %v234 = vtanh.pop %v230
  %v235 = vtanh.pop %v231
  %236 = vmatprep.subr.mxu0 0.0
  %237 = vmatpush1.msra.mxu0 %v232
  %238 = vmatprep.subr.mxu0 0.0
  %239 = vmatpush1.msra.mxu0 %v233
  %240 = vmatprep.subr.mxu0 0.0
  %241 = vmatpush1.msra.mxu0 %v234
  %242 = vmatprep.subr.mxu0 0.0
  %243 = vmatpush1.msra.mxu0 %v235
  %244 = vmatprep.subr.mxu0 0.0
  %245 = vmatpush1.msra.mxu0 0.0
  %246 = vmatprep.subr.mxu0 0.0
  %247 = vmatpush1.msra.mxu0 0.0
  %248 = vmatprep.subr.mxu0 0.0
  %249 = vmatpush1.msra.mxu0 0.0
  %250 = vmatprep.subr.mxu0 0.0
  %251 = vmatpush1.msra.mxu0 0.0
  %252 = vmatprep.subr.mxu0 0.0
  %253 = vmatpush1.msra.mxu0 0.0
  %254 = vmatprep.subr.mxu0 0.0
  %255 = vmatpush1.msra.mxu0 0.0
  %256 = vmatprep.subr.mxu0 0.0
  %257 = vmatpush1.msra.mxu0 0.0
  %258 = vmatprep.subr.mxu0 0.0
  %259 = vmatpush1.msra.mxu0 0.0
  %260 = vmatprep.subr.mxu0 0.0
  %261 = vmatpush1.msra.mxu0 0.0
  %262 = vmatprep.subr.mxu0 0.0
  %263 = vmatpush1.msra.mxu0 0.0
  %264 = vmatprep.subr.mxu0 0.0
  %265 = vmatpush1.msra.mxu0 0.0
  %266 = vmatprep.subr.mxu0 0.0
  %267 = vmatpush1.msra.mxu0 0.0
  %268 = vmatprep.subr.mxu0 0.0
  %269 = vmatpush1.msra.mxu0 0.0
  %270 = vmatprep.subr.mxu0 0.0
  %271 = vmatpush1.msra.mxu0 0.0
  %272 = vmatprep.subr.mxu0 0.0
  %273 = vmatpush1.msra.mxu0 0.0
  %274 = vmatprep.subr.mxu0 0.0
  %275 = vmatpush1.msra.mxu0 0.0
  %276 = vmatprep.subr.mxu0 0.0
  %277 = vmatpush1.msra.mxu0 0.0
  %278 = vmatprep.subr.mxu0 0.0
  %279 = vmatpush1.msra.mxu0 0.0
  %280 = vmatprep.subr.mxu0 0.0
  %281 = vmatpush1.msra.mxu0 0.0
  %282 = vmatprep.subr.mxu0 0.0
  %283 = vmatpush1.msra.mxu0 0.0
  %284 = vmatprep.subr.mxu0 0.0
  %285 = vmatpush1.msra.mxu0 0.0
  %286 = vmatprep.subr.mxu0 0.0
  %287 = vmatpush1.msra.mxu0 0.0
  %288 = vmatprep.subr.mxu0 0.0
  %289 = vmatpush1.msra.mxu0 0.0
  %290 = vmatprep.subr.mxu0 0.0
  %291 = vmatpush1.msra.mxu0 0.0
  %292 = vmatprep.subr.mxu0 0.0
  %293 = vmatpush1.msra.mxu0 0.0
  %294 = vmatprep.subr.mxu0 0.0
  %295 = vmatpush1.msra.mxu0 0.0
  %296 = vmatprep.subr.mxu0 0.0
  %297 = vmatpush1.msra.mxu0 0.0
  %298 = vmatprep.subr.mxu0 0.0
  %299 = vmatpush1.msra.mxu0 0.0
  %300 = vmatprep.mubr.f32.mxu0 0.0
  %301 = vmatmul.mubr.f32.gmra.mrb[0].mxu0 %v101
  %v302 = vpop.f32.mrb[0].mxu0
  %v303 = vadd.f32 0.0, %v302
  %v304 = vpop.f32.mrb[0].mxu0
  %305 = vmatprep.mubr.f32.mxu0 0.0
  %306 = vmatmul.mubr.f32.gmra.mrb[0].mxu0 %v104
  %v307 = vpop.f32.mrb[0].mxu0
  %v308 = vadd.f32 0.0, %v307
  %v309 = vpop.f32.mrb[0].mxu0
  %310 = vmatprep.mubr.f32.mxu0 0.0
  %311 = vmatmul.mubr.f32.gmra.mrb[0].mxu0 %v107
  %v312 = vpop.f32.mrb[0].mxu0
  %v313 = vadd.f32 0.0, %v312
  %v314 = vpop.f32.mrb[0].mxu0
  %315 = vmatprep.mubr.f32.mxu0 0.0
  %316 = vmatmul.mubr.f32.gmra.mrb[0].mxu0 %v110
  %v317 = vpop.f32.mrb[0].mxu0
  %v318 = vadd.f32 0.0, %v317
  %v319 = vpop.f32.mrb[0].mxu0
  %320 = vmatprep.mubr.f32.mxu0 0.0
  %321 = vmatmul.mubr.f32.gmra.mrb[0].mxu0 %v113
  %v322 = vpop.f32.mrb[0].mxu0
  %v323 = vadd.f32 0.0, %v322
  %v324 = vpop.f32.mrb[0].mxu0
  %325 = vdwg.mxu0
  %v326 = vadd.f32 %v323, %v208
  %327 = vst.msk [vmem:[%s4 + $0x1] sm:$0x1] %vm211, %v326
  %328 = vst.msk [vmem:[%s5] sm:$0x2] %vm213, %v326
  %v329 = vld [vmem:[%s0 + $0x2] sm:$0x1]
  %v330 = vlaneseq
  %v331 = vshrl.u32 %v330, 7
  %v332 = vsub.s32 0, %v331
  %v333 = vrot.slane %v329, %v332
  %v334 = vmul.f32 %v46, %v333
  %v335 = vmul.f32 %v51, %v333
  %v336 = vmul.f32 %v56, %v333
  %v337 = vmul.f32 %v61, %v333
  %v338 = vadd.f32 %v334, %v73
  %v339 = vadd.f32 %v335, %v77
  %v340 = vadd.f32 %v336, %v81
  %v341 = vadd.f32 %v337, %v85
  %v342 = vadd.f32 %v338, %v303
  %v343 = vadd.f32 %v339, %v308
  %v344 = vadd.f32 %v340, %v313
  %v345 = vadd.f32 %v341, %v318
  %v346 = vtanh.pop %v342
  %v347 = vtanh.pop %v343
  %v348 = vtanh.pop %v344
  %v349 = vtanh.pop %v345
  %350 = vmatprep.subr.mxu0 0.0
  %351 = vmatpush1.msra.mxu0 %v346
  %352 = vmatprep.subr.mxu0 0.0
  %353 = vmatpush1.msra.mxu0 %v347
  %354 = vmatprep.subr.mxu0 0.0
  %355 = vmatpush1.msra.mxu0 %v348
  %356 = vmatprep.subr.mxu0 0.0
  %357 = vmatpush1.msra.mxu0 %v349
  %358 = vmatprep.subr.mxu0 0.0
  %359 = vmatpush1.msra.mxu0 0.0
  %360 = vmatprep.subr.mxu0 0.0
  %361 = vmatpush1.msra.mxu0 0.0
  %362 = vmatprep.subr.mxu0 0.0
  %363 = vmatpush1.msra.mxu0 0.0
  %364 = vmatprep.subr.mxu0 0.0
  %365 = vmatpush1.msra.mxu0 0.0
  %366 = vmatprep.subr.mxu0 0.0
  %367 = vmatpush1.msra.mxu0 0.0
  %368 = vmatprep.subr.mxu0 0.0
  %369 = vmatpush1.msra.mxu0 0.0
  %370 = vmatprep.subr.mxu0 0.0
  %371 = vmatpush1.msra.mxu0 0.0
  %372 = vmatprep.subr.mxu0 0.0
  %373 = vmatpush1.msra.mxu0 0.0
  %374 = vmatprep.subr.mxu0 0.0
  %375 = vmatpush1.msra.mxu0 0.0
  %376 = vmatprep.subr.mxu0 0.0
  %377 = vmatpush1.msra.mxu0 0.0
  %378 = vmatprep.subr.mxu0 0.0
  %379 = vmatpush1.msra.mxu0 0.0
  %380 = vmatprep.subr.mxu0 0.0
  %381 = vmatpush1.msra.mxu0 0.0
  %382 = vmatprep.subr.mxu0 0.0
  %383 = vmatpush1.msra.mxu0 0.0
  %384 = vmatprep.subr.mxu0 0.0
  %385 = vmatpush1.msra.mxu0 0.0
  %386 = vmatprep.subr.mxu0 0.0
  %387 = vmatpush1.msra.mxu0 0.0
  %388 = vmatprep.subr.mxu0 0.0
  %389 = vmatpush1.msra.mxu0 0.0
  %390 = vmatprep.subr.mxu0 0.0
  %391 = vmatpush1.msra.mxu0 0.0
  %392 = vmatprep.subr.mxu0 0.0
  %393 = vmatpush1.msra.mxu0 0.0
  %394 = vmatprep.subr.mxu0 0.0
  %395 = vmatpush1.msra.mxu0 0.0
  %396 = vmatprep.subr.mxu0 0.0
  %397 = vmatpush1.msra.mxu0 0.0
  %398 = vmatprep.subr.mxu0 0.0
  %399 = vmatpush1.msra.mxu0 0.0
  %400 = vmatprep.subr.mxu0 0.0
  %401 = vmatpush1.msra.mxu0 0.0
  %402 = vmatprep.subr.mxu0 0.0
  %403 = vmatpush1.msra.mxu0 0.0
  %404 = vmatprep.subr.mxu0 0.0
  %405 = vmatpush1.msra.mxu0 0.0
  %406 = vmatprep.subr.mxu0 0.0
  %407 = vmatpush1.msra.mxu0 0.0
  %408 = vmatprep.subr.mxu0 0.0
  %409 = vmatpush1.msra.mxu0 0.0
  %410 = vmatprep.subr.mxu0 0.0
  %411 = vmatpush1.msra.mxu0 0.0
  %412 = vmatprep.subr.mxu0 0.0
  %413 = vmatpush1.msra.mxu0 0.0
  %414 = vmatprep.mubr.f32.mxu0 0.0
  %415 = vmatmul.mubr.f32.gmra.mrb[0].mxu0 %v101
  %v416 = vpop.f32.mrb[0].mxu0
  %v417 = vadd.f32 0.0, %v416
  %v418 = vpop.f32.mrb[0].mxu0
  %419 = vmatprep.mubr.f32.mxu0 0.0
  %420 = vmatmul.mubr.f32.gmra.mrb[0].mxu0 %v104
  %v421 = vpop.f32.mrb[0].mxu0
  %v422 = vadd.f32 0.0, %v421
  %v423 = vpop.f32.mrb[0].mxu0
  %424 = vmatprep.mubr.f32.mxu0 0.0
  %425 = vmatmul.mubr.f32.gmra.mrb[0].mxu0 %v107
  %v426 = vpop.f32.mrb[0].mxu0
  %v427 = vadd.f32 0.0, %v426
  %v428 = vpop.f32.mrb[0].mxu0
  %429 = vmatprep.mubr.f32.mxu0 0.0
  %430 = vmatmul.mubr.f32.gmra.mrb[0].mxu0 %v110
  %v431 = vpop.f32.mrb[0].mxu0
  %v432 = vadd.f32 0.0, %v431
  %v433 = vpop.f32.mrb[0].mxu0
  %434 = vmatprep.mubr.f32.mxu0 0.0
  %435 = vmatmul.mubr.f32.gmra.mrb[0].mxu0 %v113
  %v436 = vpop.f32.mrb[0].mxu0
  %v437 = vadd.f32 0.0, %v436
  %v438 = vpop.f32.mrb[0].mxu0
  %439 = vdwg.mxu0
  %v440 = vadd.f32 %v437, %v208
  %441 = vst.msk [vmem:[%s4 + $0x2] sm:$0x1] %vm211, %v440
  %442 = vst.msk [vmem:[%s5 + $0x1] sm:$0x2] %vm213, %v440
  %v443 = vld [vmem:[%s0 + $0x3] sm:$0x1]
  %v444 = vlaneseq
  %v445 = vshrl.u32 %v444, 7
  %v446 = vsub.s32 0, %v445
  %v447 = vrot.slane %v443, %v446
  %v448 = vmul.f32 %v46, %v447
  %v449 = vmul.f32 %v51, %v447
  %v450 = vmul.f32 %v56, %v447
  %v451 = vmul.f32 %v61, %v447
  %v452 = vadd.f32 %v448, %v73
  %v453 = vadd.f32 %v449, %v77
  %v454 = vadd.f32 %v450, %v81
  %v455 = vadd.f32 %v451, %v85
  %v456 = vadd.f32 %v452, %v417
  %v457 = vadd.f32 %v453, %v422
  %v458 = vadd.f32 %v454, %v427
  %v459 = vadd.f32 %v455, %v432
  %v460 = vtanh.pop %v456
  %v461 = vtanh.pop %v457
  %v462 = vtanh.pop %v458
  %v463 = vtanh.pop %v459
  %464 = vmatprep.subr.mxu0 0.0
  %465 = vmatpush1.msra.mxu0 %v460
  %466 = vmatprep.subr.mxu0 0.0
  %467 = vmatpush1.msra.mxu0 %v461
  %468 = vmatprep.subr.mxu0 0.0
  %469 = vmatpush1.msra.mxu0 %v462
  %470 = vmatprep.subr.mxu0 0.0
  %471 = vmatpush1.msra.mxu0 %v463
  %472 = vmatprep.subr.mxu0 0.0
  %473 = vmatpush1.msra.mxu0 0.0
  %474 = vmatprep.subr.mxu0 0.0
  %475 = vmatpush1.msra.mxu0 0.0
  %476 = vmatprep.subr.mxu0 0.0
  %477 = vmatpush1.msra.mxu0 0.0
  %478 = vmatprep.subr.mxu0 0.0
  %479 = vmatpush1.msra.mxu0 0.0
  %480 = vmatprep.subr.mxu0 0.0
  %481 = vmatpush1.msra.mxu0 0.0
  %482 = vmatprep.subr.mxu0 0.0
  %483 = vmatpush1.msra.mxu0 0.0
  %484 = vmatprep.subr.mxu0 0.0
  %485 = vmatpush1.msra.mxu0 0.0
  %486 = vmatprep.subr.mxu0 0.0
  %487 = vmatpush1.msra.mxu0 0.0
  %488 = vmatprep.subr.mxu0 0.0
  %489 = vmatpush1.msra.mxu0 0.0
  %490 = vmatprep.subr.mxu0 0.0
  %491 = vmatpush1.msra.mxu0 0.0
  %492 = vmatprep.subr.mxu0 0.0
  %493 = vmatpush1.msra.mxu0 0.0
  %494 = vmatprep.subr.mxu0 0.0
  %495 = vmatpush1.msra.mxu0 0.0
  %496 = vmatprep.subr.mxu0 0.0
  %497 = vmatpush1.msra.mxu0 0.0
  %498 = vmatprep.subr.mxu0 0.0
  %499 = vmatpush1.msra.mxu0 0.0
  %500 = vmatprep.subr.mxu0 0.0
  %501 = vmatpush1.msra.mxu0 0.0
  %502 = vmatprep.subr.mxu0 0.0
  %503 = vmatpush1.msra.mxu0 0.0
  %504 = vmatprep.subr.mxu0 0.0
  %505 = vmatpush1.msra.mxu0 0.0
  %506 = vmatprep.subr.mxu0 0.0
  %507 = vmatpush1.msra.mxu0 0.0
  %508 = vmatprep.subr.mxu0 0.0
  %509 = vmatpush1.msra.mxu0 0.0
  %510 = vmatprep.subr.mxu0 0.0
  %511 = vmatpush1.msra.mxu0 0.0
  %512 = vmatprep.subr.mxu0 0.0
  %513 = vmatpush1.msra.mxu0 0.0
  %514 = vmatprep.subr.mxu0 0.0
  %515 = vmatpush1.msra.mxu0 0.0
  %516 = vmatprep.subr.mxu0 0.0
  %517 = vmatpush1.msra.mxu0 0.0
  %518 = vmatprep.subr.mxu0 0.0
  %519 = vmatpush1.msra.mxu0 0.0
  %520 = vmatprep.subr.mxu0 0.0
  %521 = vmatpush1.msra.mxu0 0.0
  %522 = vmatprep.subr.mxu0 0.0
  %523 = vmatpush1.msra.mxu0 0.0
  %524 = vmatprep.subr.mxu0 0.0
  %525 = vmatpush1.msra.mxu0 0.0
  %526 = vmatprep.subr.mxu0 0.0
  %527 = vmatpush1.msra.mxu0 0.0
  %528 = vmatprep.mubr.f32.mxu0 0.0
  %529 = vmatmul.mubr.f32.gmra.mrb[0].mxu0 %v101
  %v530 = vpop.f32.mrb[0].mxu0
  %v531 = vadd.f32 0.0, %v530
  %v532 = vpop.f32.mrb[0].mxu0
  %533 = vmatprep.mubr.f32.mxu0 0.0
  %534 = vmatmul.mubr.f32.gmra.mrb[0].mxu0 %v104
  %v535 = vpop.f32.mrb[0].mxu0
  %v536 = vadd.f32 0.0, %v535
  %v537 = vpop.f32.mrb[0].mxu0
  %538 = vmatprep.mubr.f32.mxu0 0.0
  %539 = vmatmul.mubr.f32.gmra.mrb[0].mxu0 %v107
  %v540 = vpop.f32.mrb[0].mxu0
  %v541 = vadd.f32 0.0, %v540
  %v542 = vpop.f32.mrb[0].mxu0
  %543 = vmatprep.mubr.f32.mxu0 0.0
  %544 = vmatmul.mubr.f32.gmra.mrb[0].mxu0 %v110
  %v545 = vpop.f32.mrb[0].mxu0
  %v546 = vadd.f32 0.0, %v545
  %v547 = vpop.f32.mrb[0].mxu0
  %548 = vmatprep.mubr.f32.mxu0 0.0
  %549 = vmatmul.mubr.f32.gmra.mrb[0].mxu0 %v113
  %v550 = vpop.f32.mrb[0].mxu0
  %v551 = vadd.f32 0.0, %v550
  %v552 = vpop.f32.mrb[0].mxu0
  %553 = vdwg.mxu0
  %v554 = vadd.f32 %v551, %v208
  %555 = vst.msk [vmem:[%s4 + $0x3] sm:$0x1] %vm211, %v554
  %556 = vst.msk [vmem:[%s5 + $0x2] sm:$0x2] %vm213, %v554
  %v557 = vld [vmem:[%s0 + $0x4] sm:$0x1]
  %v558 = vlaneseq
  %v559 = vshrl.u32 %v558, 7
  %v560 = vsub.s32 0, %v559
  %v561 = vrot.slane %v557, %v560
  %v562 = vmul.f32 %v46, %v561
  %v563 = vmul.f32 %v51, %v561
  %v564 = vmul.f32 %v56, %v561
  %v565 = vmul.f32 %v61, %v561
  %v566 = vadd.f32 %v562, %v73
  %v567 = vadd.f32 %v563, %v77
  %v568 = vadd.f32 %v564, %v81
  %v569 = vadd.f32 %v565, %v85
  %v570 = vadd.f32 %v566, %v531
  %v571 = vadd.f32 %v567, %v536
  %v572 = vadd.f32 %v568, %v541
  %v573 = vadd.f32 %v569, %v546
  %v574 = vtanh.pop %v570
  %v575 = vtanh.pop %v571
  %v576 = vtanh.pop %v572
  %v577 = vtanh.pop %v573
  %578 = vmatprep.subr.mxu0 0.0
  %579 = vmatpush1.msra.mxu0 %v574
  %580 = vmatprep.subr.mxu0 0.0
  %581 = vmatpush1.msra.mxu0 %v575
  %582 = vmatprep.subr.mxu0 0.0
  %583 = vmatpush1.msra.mxu0 %v576
  %584 = vmatprep.subr.mxu0 0.0
  %585 = vmatpush1.msra.mxu0 %v577
  %586 = vmatprep.subr.mxu0 0.0
  %587 = vmatpush1.msra.mxu0 0.0
  %588 = vmatprep.subr.mxu0 0.0
  %589 = vmatpush1.msra.mxu0 0.0
  %590 = vmatprep.subr.mxu0 0.0
  %591 = vmatpush1.msra.mxu0 0.0
  %592 = vmatprep.subr.mxu0 0.0
  %593 = vmatpush1.msra.mxu0 0.0
  %594 = vmatprep.subr.mxu0 0.0
  %595 = vmatpush1.msra.mxu0 0.0
  %596 = vmatprep.subr.mxu0 0.0
  %597 = vmatpush1.msra.mxu0 0.0
  %598 = vmatprep.subr.mxu0 0.0
  %599 = vmatpush1.msra.mxu0 0.0
  %600 = vmatprep.subr.mxu0 0.0
  %601 = vmatpush1.msra.mxu0 0.0
  %602 = vmatprep.subr.mxu0 0.0
  %603 = vmatpush1.msra.mxu0 0.0
  %604 = vmatprep.subr.mxu0 0.0
  %605 = vmatpush1.msra.mxu0 0.0
  %606 = vmatprep.subr.mxu0 0.0
  %607 = vmatpush1.msra.mxu0 0.0
  %608 = vmatprep.subr.mxu0 0.0
  %609 = vmatpush1.msra.mxu0 0.0
  %610 = vmatprep.subr.mxu0 0.0
  %611 = vmatpush1.msra.mxu0 0.0
  %612 = vmatprep.subr.mxu0 0.0
  %613 = vmatpush1.msra.mxu0 0.0
  %614 = vmatprep.subr.mxu0 0.0
  %615 = vmatpush1.msra.mxu0 0.0
  %616 = vmatprep.subr.mxu0 0.0
  %617 = vmatpush1.msra.mxu0 0.0
  %618 = vmatprep.subr.mxu0 0.0
  %619 = vmatpush1.msra.mxu0 0.0
  %620 = vmatprep.subr.mxu0 0.0
  %621 = vmatpush1.msra.mxu0 0.0
  %622 = vmatprep.subr.mxu0 0.0
  %623 = vmatpush1.msra.mxu0 0.0
  %624 = vmatprep.subr.mxu0 0.0
  %625 = vmatpush1.msra.mxu0 0.0
  %626 = vmatprep.subr.mxu0 0.0
  %627 = vmatpush1.msra.mxu0 0.0
  %628 = vmatprep.subr.mxu0 0.0
  %629 = vmatpush1.msra.mxu0 0.0
  %630 = vmatprep.subr.mxu0 0.0
  %631 = vmatpush1.msra.mxu0 0.0
  %632 = vmatprep.subr.mxu0 0.0
  %633 = vmatpush1.msra.mxu0 0.0
  %634 = vmatprep.subr.mxu0 0.0
  %635 = vmatpush1.msra.mxu0 0.0
  %636 = vmatprep.subr.mxu0 0.0
  %637 = vmatpush1.msra.mxu0 0.0
  %638 = vmatprep.subr.mxu0 0.0
  %639 = vmatpush1.msra.mxu0 0.0
  %640 = vmatprep.subr.mxu0 0.0
  %641 = vmatpush1.msra.mxu0 0.0
  %642 = vmatprep.mubr.f32.mxu0 0.0
  %643 = vmatmul.mubr.f32.gmra.mrb[0].mxu0 %v101
  %v644 = vpop.f32.mrb[0].mxu0
  %v645 = vadd.f32 0.0, %v644
  %v646 = vpop.f32.mrb[0].mxu0
  %647 = vmatprep.mubr.f32.mxu0 0.0
  %648 = vmatmul.mubr.f32.gmra.mrb[0].mxu0 %v104
  %v649 = vpop.f32.mrb[0].mxu0
  %v650 = vadd.f32 0.0, %v649
  %v651 = vpop.f32.mrb[0].mxu0
  %652 = vmatprep.mubr.f32.mxu0 0.0
  %653 = vmatmul.mubr.f32.gmra.mrb[0].mxu0 %v107
  %v654 = vpop.f32.mrb[0].mxu0
  %v655 = vadd.f32 0.0, %v654
  %v656 = vpop.f32.mrb[0].mxu0
  %657 = vmatprep.mubr.f32.mxu0 0.0
  %658 = vmatmul.mubr.f32.gmra.mrb[0].mxu0 %v110
  %v659 = vpop.f32.mrb[0].mxu0
  %v660 = vadd.f32 0.0, %v659
  %v661 = vpop.f32.mrb[0].mxu0
  %662 = vmatprep.mubr.f32.mxu0 0.0
  %663 = vmatmul.mubr.f32.gmra.mrb[0].mxu0 %v113
  %v664 = vpop.f32.mrb[0].mxu0
  %v665 = vadd.f32 0.0, %v664
  %v666 = vpop.f32.mrb[0].mxu0
  %667 = vdwg.mxu0
  %v668 = vadd.f32 %v665, %v208
  %669 = vst.msk [vmem:[%s4 + $0x4] sm:$0x1] %vm211, %v668
  %670 = vst.msk [vmem:[%s5 + $0x3] sm:$0x2] %vm213, %v668
  %v671 = vld [vmem:[%s0 + $0x5] sm:$0x1]
  %v672 = vlaneseq
  %v673 = vshrl.u32 %v672, 7
  %v674 = vsub.s32 0, %v673
  %v675 = vrot.slane %v671, %v674
  %v676 = vmul.f32 %v46, %v675
  %v677 = vmul.f32 %v51, %v675
  %v678 = vmul.f32 %v56, %v675
  %v679 = vmul.f32 %v61, %v675
  %v680 = vadd.f32 %v676, %v73
  %v681 = vadd.f32 %v677, %v77
  %v682 = vadd.f32 %v678, %v81
  %v683 = vadd.f32 %v679, %v85
  %v684 = vadd.f32 %v680, %v645
  %v685 = vadd.f32 %v681, %v650
  %v686 = vadd.f32 %v682, %v655
  %v687 = vadd.f32 %v683, %v660
  %v688 = vtanh.pop %v684
  %v689 = vtanh.pop %v685
  %v690 = vtanh.pop %v686
  %v691 = vtanh.pop %v687
  %692 = vmatprep.subr.mxu0 0.0
  %693 = vmatpush1.msra.mxu0 %v688
  %694 = vmatprep.subr.mxu0 0.0
  %695 = vmatpush1.msra.mxu0 %v689
  %696 = vmatprep.subr.mxu0 0.0
  %697 = vmatpush1.msra.mxu0 %v690
  %698 = vmatprep.subr.mxu0 0.0
  %699 = vmatpush1.msra.mxu0 %v691
  %700 = vmatprep.subr.mxu0 0.0
  %701 = vmatpush1.msra.mxu0 0.0
  %702 = vmatprep.subr.mxu0 0.0
  %703 = vmatpush1.msra.mxu0 0.0
  %704 = vmatprep.subr.mxu0 0.0
  %705 = vmatpush1.msra.mxu0 0.0
  %706 = vmatprep.subr.mxu0 0.0
  %707 = vmatpush1.msra.mxu0 0.0
  %708 = vmatprep.subr.mxu0 0.0
  %709 = vmatpush1.msra.mxu0 0.0
  %710 = vmatprep.subr.mxu0 0.0
  %711 = vmatpush1.msra.mxu0 0.0
  %712 = vmatprep.subr.mxu0 0.0
  %713 = vmatpush1.msra.mxu0 0.0
  %714 = vmatprep.subr.mxu0 0.0
  %715 = vmatpush1.msra.mxu0 0.0
  %716 = vmatprep.subr.mxu0 0.0
  %717 = vmatpush1.msra.mxu0 0.0
  %718 = vmatprep.subr.mxu0 0.0
  %719 = vmatpush1.msra.mxu0 0.0
  %720 = vmatprep.subr.mxu0 0.0
  %721 = vmatpush1.msra.mxu0 0.0
  %722 = vmatprep.subr.mxu0 0.0
  %723 = vmatpush1.msra.mxu0 0.0
  %724 = vmatprep.subr.mxu0 0.0
  %725 = vmatpush1.msra.mxu0 0.0
  %726 = vmatprep.subr.mxu0 0.0
  %727 = vmatpush1.msra.mxu0 0.0
  %728 = vmatprep.subr.mxu0 0.0
  %729 = vmatpush1.msra.mxu0 0.0
  %730 = vmatprep.subr.mxu0 0.0
  %731 = vmatpush1.msra.mxu0 0.0
  %732 = vmatprep.subr.mxu0 0.0
  %733 = vmatpush1.msra.mxu0 0.0
  %734 = vmatprep.subr.mxu0 0.0
  %735 = vmatpush1.msra.mxu0 0.0
  %736 = vmatprep.subr.mxu0 0.0
  %737 = vmatpush1.msra.mxu0 0.0
  %738 = vmatprep.subr.mxu0 0.0
  %739 = vmatpush1.msra.mxu0 0.0
  %740 = vmatprep.subr.mxu0 0.0
  %741 = vmatpush1.msra.mxu0 0.0
  %742 = vmatprep.subr.mxu0 0.0
  %743 = vmatpush1.msra.mxu0 0.0
  %744 = vmatprep.subr.mxu0 0.0
  %745 = vmatpush1.msra.mxu0 0.0
  %746 = vmatprep.subr.mxu0 0.0
  %747 = vmatpush1.msra.mxu0 0.0
  %748 = vmatprep.subr.mxu0 0.0
  %749 = vmatpush1.msra.mxu0 0.0
  %750 = vmatprep.subr.mxu0 0.0
  %751 = vmatpush1.msra.mxu0 0.0
  %752 = vmatprep.subr.mxu0 0.0
  %753 = vmatpush1.msra.mxu0 0.0
  %754 = vmatprep.subr.mxu0 0.0
  %755 = vmatpush1.msra.mxu0 0.0
  %756 = vmatprep.mubr.f32.mxu0 0.0
  %757 = vmatmul.mubr.f32.gmra.mrb[0].mxu0 %v101
  %v758 = vpop.f32.mrb[0].mxu0
  %v759 = vadd.f32 0.0, %v758
  %v760 = vpop.f32.mrb[0].mxu0
  %761 = vmatprep.mubr.f32.mxu0 0.0
  %762 = vmatmul.mubr.f32.gmra.mrb[0].mxu0 %v104
  %v763 = vpop.f32.mrb[0].mxu0
  %v764 = vadd.f32 0.0, %v763
  %v765 = vpop.f32.mrb[0].mxu0
  %766 = vmatprep.mubr.f32.mxu0 0.0
  %767 = vmatmul.mubr.f32.gmra.mrb[0].mxu0 %v107
  %v768 = vpop.f32.mrb[0].mxu0
  %v769 = vadd.f32 0.0, %v768
  %v770 = vpop.f32.mrb[0].mxu0
  %771 = vmatprep.mubr.f32.mxu0 0.0
  %772 = vmatmul.mubr.f32.gmra.mrb[0].mxu0 %v110
  %v773 = vpop.f32.mrb[0].mxu0
  %v774 = vadd.f32 0.0, %v773
  %v775 = vpop.f32.mrb[0].mxu0
  %776 = vmatprep.mubr.f32.mxu0 0.0
  %777 = vmatmul.mubr.f32.gmra.mrb[0].mxu0 %v113
  %v778 = vpop.f32.mrb[0].mxu0
  %v779 = vadd.f32 0.0, %v778
  %v780 = vpop.f32.mrb[0].mxu0
  %781 = vdwg.mxu0
  %v782 = vadd.f32 %v779, %v208
  %783 = vst.msk [vmem:[%s4 + $0x5] sm:$0x1] %vm211, %v782
  %784 = vst.msk [vmem:[%s5 + $0x4] sm:$0x2] %vm213, %v782
  %v785 = vld [vmem:[%s0 + $0x6] sm:$0x1]
  %v786 = vlaneseq
  %v787 = vshrl.u32 %v786, 7
  %v788 = vsub.s32 0, %v787
  %v789 = vrot.slane %v785, %v788
  %v790 = vmul.f32 %v46, %v789
  %v791 = vmul.f32 %v51, %v789
  %v792 = vmul.f32 %v56, %v789
  %v793 = vmul.f32 %v61, %v789
  %v794 = vadd.f32 %v790, %v73
  %v795 = vadd.f32 %v791, %v77
  %v796 = vadd.f32 %v792, %v81
  %v797 = vadd.f32 %v793, %v85
  %v798 = vadd.f32 %v794, %v759
  %v799 = vadd.f32 %v795, %v764
  %v800 = vadd.f32 %v796, %v769
  %v801 = vadd.f32 %v797, %v774
  %v802 = vtanh.pop %v798
  %v803 = vtanh.pop %v799
  %v804 = vtanh.pop %v800
  %v805 = vtanh.pop %v801
  %806 = vmatprep.subr.mxu0 0.0
  %807 = vmatpush1.msra.mxu0 %v802
  %808 = vmatprep.subr.mxu0 0.0
  %809 = vmatpush1.msra.mxu0 %v803
  %810 = vmatprep.subr.mxu0 0.0
  %811 = vmatpush1.msra.mxu0 %v804
  %812 = vmatprep.subr.mxu0 0.0
  %813 = vmatpush1.msra.mxu0 %v805
  %814 = vmatprep.subr.mxu0 0.0
  %815 = vmatpush1.msra.mxu0 0.0
  %816 = vmatprep.subr.mxu0 0.0
  %817 = vmatpush1.msra.mxu0 0.0
  %818 = vmatprep.subr.mxu0 0.0
  %819 = vmatpush1.msra.mxu0 0.0
  %820 = vmatprep.subr.mxu0 0.0
  %821 = vmatpush1.msra.mxu0 0.0
  %822 = vmatprep.subr.mxu0 0.0
  %823 = vmatpush1.msra.mxu0 0.0
  %824 = vmatprep.subr.mxu0 0.0
  %825 = vmatpush1.msra.mxu0 0.0
  %826 = vmatprep.subr.mxu0 0.0
  %827 = vmatpush1.msra.mxu0 0.0
  %828 = vmatprep.subr.mxu0 0.0
  %829 = vmatpush1.msra.mxu0 0.0
  %830 = vmatprep.subr.mxu0 0.0
  %831 = vmatpush1.msra.mxu0 0.0
  %832 = vmatprep.subr.mxu0 0.0
  %833 = vmatpush1.msra.mxu0 0.0
  %834 = vmatprep.subr.mxu0 0.0
  %835 = vmatpush1.msra.mxu0 0.0
  %836 = vmatprep.subr.mxu0 0.0
  %837 = vmatpush1.msra.mxu0 0.0
  %838 = vmatprep.subr.mxu0 0.0
  %839 = vmatpush1.msra.mxu0 0.0
  %840 = vmatprep.subr.mxu0 0.0
  %841 = vmatpush1.msra.mxu0 0.0
  %842 = vmatprep.subr.mxu0 0.0
  %843 = vmatpush1.msra.mxu0 0.0
  %844 = vmatprep.subr.mxu0 0.0
  %845 = vmatpush1.msra.mxu0 0.0
  %846 = vmatprep.subr.mxu0 0.0
  %847 = vmatpush1.msra.mxu0 0.0
  %848 = vmatprep.subr.mxu0 0.0
  %849 = vmatpush1.msra.mxu0 0.0
  %850 = vmatprep.subr.mxu0 0.0
  %851 = vmatpush1.msra.mxu0 0.0
  %852 = vmatprep.subr.mxu0 0.0
  %853 = vmatpush1.msra.mxu0 0.0
  %854 = vmatprep.subr.mxu0 0.0
  %855 = vmatpush1.msra.mxu0 0.0
  %856 = vmatprep.subr.mxu0 0.0
  %857 = vmatpush1.msra.mxu0 0.0
  %858 = vmatprep.subr.mxu0 0.0
  %859 = vmatpush1.msra.mxu0 0.0
  %860 = vmatprep.subr.mxu0 0.0
  %861 = vmatpush1.msra.mxu0 0.0
  %862 = vmatprep.subr.mxu0 0.0
  %863 = vmatpush1.msra.mxu0 0.0
  %864 = vmatprep.subr.mxu0 0.0
  %865 = vmatpush1.msra.mxu0 0.0
  %866 = vmatprep.subr.mxu0 0.0
  %867 = vmatpush1.msra.mxu0 0.0
  %868 = vmatprep.subr.mxu0 0.0
  %869 = vmatpush1.msra.mxu0 0.0
  %870 = vmatprep.mubr.f32.mxu0 0.0
  %871 = vmatmul.mubr.f32.gmra.mrb[0].mxu0 %v101
  %v872 = vpop.f32.mrb[0].mxu0
  %v873 = vadd.f32 0.0, %v872
  %v874 = vpop.f32.mrb[0].mxu0
  %875 = vmatprep.mubr.f32.mxu0 0.0
  %876 = vmatmul.mubr.f32.gmra.mrb[0].mxu0 %v104
  %v877 = vpop.f32.mrb[0].mxu0
  %v878 = vadd.f32 0.0, %v877
  %v879 = vpop.f32.mrb[0].mxu0
  %880 = vmatprep.mubr.f32.mxu0 0.0
  %881 = vmatmul.mubr.f32.gmra.mrb[0].mxu0 %v107
  %v882 = vpop.f32.mrb[0].mxu0
  %v883 = vadd.f32 0.0, %v882
  %v884 = vpop.f32.mrb[0].mxu0
  %885 = vmatprep.mubr.f32.mxu0 0.0
  %886 = vmatmul.mubr.f32.gmra.mrb[0].mxu0 %v110
  %v887 = vpop.f32.mrb[0].mxu0
  %v888 = vadd.f32 0.0, %v887
  %v889 = vpop.f32.mrb[0].mxu0
  %890 = vmatprep.mubr.f32.mxu0 0.0
  %891 = vmatmul.mubr.f32.gmra.mrb[0].mxu0 %v113
  %v892 = vpop.f32.mrb[0].mxu0
  %v893 = vadd.f32 0.0, %v892
  %v894 = vpop.f32.mrb[0].mxu0
  %895 = vdwg.mxu0
  %v896 = vadd.f32 %v893, %v208
  %897 = vst.msk [vmem:[%s4 + $0x6] sm:$0x1] %vm211, %v896
  %898 = vst.msk [vmem:[%s5 + $0x5] sm:$0x2] %vm213, %v896
  %v899 = vld [vmem:[%s0 + $0x7] sm:$0x1]
  %v900 = vlaneseq
  %v901 = vshrl.u32 %v900, 7
  %v902 = vsub.s32 0, %v901
  %v903 = vrot.slane %v899, %v902
  %v904 = vmul.f32 %v46, %v903
  %v905 = vmul.f32 %v51, %v903
  %v906 = vmul.f32 %v56, %v903
  %v907 = vmul.f32 %v61, %v903
  %v908 = vadd.f32 %v904, %v73
  %v909 = vadd.f32 %v905, %v77
  %v910 = vadd.f32 %v906, %v81
  %v911 = vadd.f32 %v907, %v85
  %v912 = vadd.f32 %v908, %v873
  %v913 = vadd.f32 %v909, %v878
  %v914 = vadd.f32 %v910, %v883
  %v915 = vadd.f32 %v911, %v888
  %v916 = vtanh.pop %v912
  %v917 = vtanh.pop %v913
  %v918 = vtanh.pop %v914
  %v919 = vtanh.pop %v915
  %920 = vmatprep.subr.mxu0 0.0
  %921 = vmatpush1.msra.mxu0 %v916
  %922 = vmatprep.subr.mxu0 0.0
  %923 = vmatpush1.msra.mxu0 %v917
  %924 = vmatprep.subr.mxu0 0.0
  %925 = vmatpush1.msra.mxu0 %v918
  %926 = vmatprep.subr.mxu0 0.0
  %927 = vmatpush1.msra.mxu0 %v919
  %928 = vmatprep.subr.mxu0 0.0
  %929 = vmatpush1.msra.mxu0 0.0
  %930 = vmatprep.subr.mxu0 0.0
  %931 = vmatpush1.msra.mxu0 0.0
  %932 = vmatprep.subr.mxu0 0.0
  %933 = vmatpush1.msra.mxu0 0.0
  %934 = vmatprep.subr.mxu0 0.0
  %935 = vmatpush1.msra.mxu0 0.0
  %936 = vmatprep.subr.mxu0 0.0
  %937 = vmatpush1.msra.mxu0 0.0
  %938 = vmatprep.subr.mxu0 0.0
  %939 = vmatpush1.msra.mxu0 0.0
  %940 = vmatprep.subr.mxu0 0.0
  %941 = vmatpush1.msra.mxu0 0.0
  %942 = vmatprep.subr.mxu0 0.0
  %943 = vmatpush1.msra.mxu0 0.0
  %944 = vmatprep.subr.mxu0 0.0
  %945 = vmatpush1.msra.mxu0 0.0
  %946 = vmatprep.subr.mxu0 0.0
  %947 = vmatpush1.msra.mxu0 0.0
  %948 = vmatprep.subr.mxu0 0.0
  %949 = vmatpush1.msra.mxu0 0.0
  %950 = vmatprep.subr.mxu0 0.0
  %951 = vmatpush1.msra.mxu0 0.0
  %952 = vmatprep.subr.mxu0 0.0
  %953 = vmatpush1.msra.mxu0 0.0
  %954 = vmatprep.subr.mxu0 0.0
  %955 = vmatpush1.msra.mxu0 0.0
  %956 = vmatprep.subr.mxu0 0.0
  %957 = vmatpush1.msra.mxu0 0.0
  %958 = vmatprep.subr.mxu0 0.0
  %959 = vmatpush1.msra.mxu0 0.0
  %960 = vmatprep.subr.mxu0 0.0
  %961 = vmatpush1.msra.mxu0 0.0
  %962 = vmatprep.subr.mxu0 0.0
  %963 = vmatpush1.msra.mxu0 0.0
  %964 = vmatprep.subr.mxu0 0.0
  %965 = vmatpush1.msra.mxu0 0.0
  %966 = vmatprep.subr.mxu0 0.0
  %967 = vmatpush1.msra.mxu0 0.0
  %968 = vmatprep.subr.mxu0 0.0
  %969 = vmatpush1.msra.mxu0 0.0
  %970 = vmatprep.subr.mxu0 0.0
  %971 = vmatpush1.msra.mxu0 0.0
  %972 = vmatprep.subr.mxu0 0.0
  %973 = vmatpush1.msra.mxu0 0.0
  %974 = vmatprep.subr.mxu0 0.0
  %975 = vmatpush1.msra.mxu0 0.0
  %976 = vmatprep.subr.mxu0 0.0
  %977 = vmatpush1.msra.mxu0 0.0
  %978 = vmatprep.subr.mxu0 0.0
  %979 = vmatpush1.msra.mxu0 0.0
  %980 = vmatprep.subr.mxu0 0.0
  %981 = vmatpush1.msra.mxu0 0.0
  %982 = vmatprep.subr.mxu0 0.0
  %983 = vmatpush1.msra.mxu0 0.0
  %984 = vmatprep.mubr.f32.mxu0 0.0
  %985 = vmatmul.mubr.f32.gmra.mrb[0].mxu0 %v101
  %v986 = vpop.f32.mrb[0].mxu0
  %v987 = vadd.f32 0.0, %v986
  %v988 = vpop.f32.mrb[0].mxu0
  %989 = vmatprep.mubr.f32.mxu0 0.0
  %990 = vmatmul.mubr.f32.gmra.mrb[0].mxu0 %v104
  %v991 = vpop.f32.mrb[0].mxu0
  %v992 = vadd.f32 0.0, %v991
  %v993 = vpop.f32.mrb[0].mxu0
  %994 = vmatprep.mubr.f32.mxu0 0.0
  %995 = vmatmul.mubr.f32.gmra.mrb[0].mxu0 %v107
  %v996 = vpop.f32.mrb[0].mxu0
  %v997 = vadd.f32 0.0, %v996
  %v998 = vpop.f32.mrb[0].mxu0
  %999 = vmatprep.mubr.f32.mxu0 0.0
  %1000 = vmatmul.mubr.f32.gmra.mrb[0].mxu0 %v110
  %v1001 = vpop.f32.mrb[0].mxu0
  %v1002 = vadd.f32 0.0, %v1001
  %v1003 = vpop.f32.mrb[0].mxu0
  %1004 = vmatprep.mubr.f32.mxu0 0.0
  %1005 = vmatmul.mubr.f32.gmra.mrb[0].mxu0 %v113
  %v1006 = vpop.f32.mrb[0].mxu0
  %v1007 = vadd.f32 0.0, %v1006
  %v1008 = vpop.f32.mrb[0].mxu0
  %1009 = vdwg.mxu0
  %v1010 = vadd.f32 %v1007, %v208
  %1011 = vst.msk [vmem:[%s4 + $0x7] sm:$0x1] %vm211, %v1010
  %1012 = vst.msk [vmem:[%s5 + $0x6] sm:$0x2] %vm213, %v1010
  %vm1013 = vcmask 15360
  %1014 = vst.msk [vmem:[#allocation2] sm:$0xff] %vm1013, %v987
  %1015 = vst.msk [vmem:[#allocation2 + $0x8] sm:$0xff] %vm1013, %v992
  %1016 = vst.msk [vmem:[#allocation2 + $0x10] sm:$0xff] %vm1013, %v997
  %1017 = vst.msk [vmem:[#allocation2 + $0x18] sm:$0xff] %vm1013, %v1002
  // Predicated region
  $region22: #{gaussian_rnn_forward.1} parent=0 // pred_check
    _
  $region23: #{gaussian_rnn_forward.1} parent=0 // pred_check_branch
    %1019 = sbr.rel (0) target = $region25
  $region24: #{gaussian_rnn_forward.1} parent=0 // pred_region
    _
  $region25: #{gaussian_rnn_forward.1} parent=0 // pred_fallthru
    _
  // Predicated region
  $region26: #{gaussian_rnn_forward.1} parent=0 // pred_check
    _
  $region27: #{gaussian_rnn_forward.1} parent=0 // pred_check_branch
    %1021 = sbr.rel (0) target = $region29
  $region28: #{gaussian_rnn_forward.1} parent=0 // pred_region
    _
  $region29: #{gaussian_rnn_forward.1} parent=0 // pred_fallthru
    _
  // Predicated region
  $region30: #{gaussian_rnn_forward.1} parent=0 // pred_check
    _
  $region31: #{gaussian_rnn_forward.1} parent=0 // pred_check_branch
    %1023 = sbr.rel (0) target = $region33
  $region32: #{gaussian_rnn_forward.1} parent=0 // pred_region
    _
  $region33: #{gaussian_rnn_forward.1} parent=0 // pred_fallthru
    _
  // Predicated region
  $region34: #{gaussian_rnn_forward.1} parent=0 // pred_check
    _
  $region35: #{gaussian_rnn_forward.1} parent=0 // pred_check_branch
    %1025 = sbr.rel (0) target = $region37
  $region36: #{gaussian_rnn_forward.1} parent=0 // pred_region
    _
  $region37: #{gaussian_rnn_forward.1} parent=0 // pred_fallthru
    _

</llo_original>
